<compile_context>
chip_gen: v7x
topology: tpu7x:2x2x1
jax: 0.10.0
libtpu: 0.0.40
codegen_flags: <defaults>
</compile_context>

<pallas_src>
import jax
import jax.numpy as jnp
from jax.experimental import pallas as pl
from jax.experimental.pallas import tpu as pltpu


_LANE = 128
_MAX_TILE_ROWS = 8192        # cap for the VMEM-pipeline row tile
_MIN_PALLAS_ROWS = 64        # below this, per-call overhead dominates -> XLA
_MAX_DMA_CHUNKS = 4          # overlapped HBM->HBM DMA descriptors


def _sublane(dtype_bytes: int) -> int:
    """Rows per packed sublane tile for this dtype (8 f32 / 16 bf16 / 32 i8)."""
    return max(8, 32 // max(dtype_bytes, 1))


def _vmem_params():
    """(working-set budget, explicit scoped-VMEM limit) per TPU generation."""
    try:
        phys = int(getattr(pltpu.get_tpu_info(), "vmem_capacity_bytes",
                           128 << 20))
    except Exception:  # no TPU info available -> conservative default
        phys = 128 << 20
    # v7x-class chips expose 64 MiB of VMEM per TC; v5e/v6e expose 128 MiB.
    budget = (20 << 20) if phys <= (64 << 20) else (24 << 20)
    limit = min(budget + (8 << 20), phys // 2)
    return budget, limit


# ----------------------------------------------------------------------------
# Path 1 (default): chunked HBM->HBM DMA, slice done in the DMA descriptor.
# ----------------------------------------------------------------------------
def _row_chunks(B: int, sub: int, max_chunks: int = _MAX_DMA_CHUNKS):
    """Static (start, rows) chunks: near-equal, sublane-aligned starts."""
    n = max(1, min(max_chunks, B // sub))
    rows = -(-B // n)                  # ceil(B / n)
    rows = -(-rows // sub) * sub       # round up to the dtype's sublane tile
    chunks, r = [], 0
    while r < B:
        c = min(rows, B - r)
        chunks.append((r, c))
        r += c
    return tuple(chunks)


def _position_slice_dma(x2: jnp.ndarray, width: int) -> jnp.ndarray:
    """Copy x2[:, :width] via overlapped HBM->HBM DMAs (no VMEM staging)."""
    B, _ = x2.shape
    dtype_bytes = jnp.dtype(x2.dtype).itemsize
    chunks = _row_chunks(B, _sublane(dtype_bytes))

    def kernel(x_hbm, o_hbm, sems):
        copies = []
        for idx, (r0, rows) in enumerate(chunks):
            cp = pltpu.make_async_copy(
                x_hbm.at[pl.ds(r0, rows), pl.ds(0, width)],  # slice in the DMA
                o_hbm.at[pl.ds(r0, rows)],
                sems.at[idx])
            cp.start()
            copies.append(cp)
        for cp in copies:  # all chunks in flight before any wait -> overlap
            cp.wait()

    return pl.pallas_call(
        kernel,
        out_shape=jax.ShapeDtypeStruct((B, width), x2.dtype),
        in_specs=[pl.BlockSpec(memory_space=pl.ANY)],
        out_specs=pl.BlockSpec(memory_space=pl.ANY),
        scratch_shapes=[pltpu.SemaphoreType.DMA((len(chunks),))],
        compiler_params=pltpu.CompilerParams(has_side_effects=True),
        cost_estimate=pl.CostEstimate(
            flops=0, transcendentals=0,
            bytes_accessed=2 * B * width * dtype_bytes),
    )(x2)


# ----------------------------------------------------------------------------
# Path 2 (mode="vmem"): BlockSpec-pipelined copy, slice done in the input DMA.
# ----------------------------------------------------------------------------
def _copy_kernel(x_ref, o_ref):
    # Pure copy: the last-dim slice already happened in the input DMA
    # (the input BlockSpec only covers the first `width` lanes of each row).
    o_ref[...] = x_ref[...]


def _pick_tile_rows(B: int, width: int, dtype_bytes: int, budget: int) -> int:
    """Largest sublane-aligned row tile under the VMEM budget, balanced so
    that no grid step is a sliver tail block."""
    sub = _sublane(dtype_bytes)
    per_row = 2 * (width + width) * dtype_bytes   # double-buffered in + out
    tm = budget // max(per_row, 1)
    tm = min(tm, _MAX_TILE_ROWS, B)
    tm = max((tm // sub) * sub, sub)
    if tm >= B:
        return B                                   # single full-extent block
    nsteps = -(-B // tm)                           # steps at the max tile size
    tm_bal = -(-B // nsteps)                       # near-equal rows per step
    tm_bal = -(-tm_bal // sub) * sub               # round up to sublane tile
    return max(tm_bal, sub)


def _position_slice_vmem(x2: jnp.ndarray, width: int,
                         tile_rows=None, core_parallel: bool = False):
    B, _ = x2.shape
    dtype_bytes = jnp.dtype(x2.dtype).itemsize
    sub = _sublane(dtype_bytes)
    budget, vmem_limit = _vmem_params()
    per_row = 2 * (width + width) * dtype_bytes

    if tile_rows is None:
        tm = _pick_tile_rows(B, width, dtype_bytes, budget)
    else:
        # Validate / clamp the override: sublane alignment + VMEM budget + <=B.
        if tile_rows <= 0:
            raise ValueError(f"tile_rows must be positive, got {tile_rows}")
        if tile_rows >= B:
            tm = B
        else:
            tm = max((min(tile_rows, _MAX_TILE_ROWS) // sub) * sub, sub)
            cap = max((budget // max(per_row, 1) // sub) * sub, sub)
            tm = min(tm, cap)

    grid = (pl.cdiv(B, tm),)
    dim_sem = (pltpu.CORE_PARALLEL if core_parallel else "parallel",)
    # TODO(synk): on v7x, also shard the chunked-DMA path across both
    # TensorCores (pl.core_map over a tensorcore mesh), not just this pipeline.

    return pl.pallas_call(
        _copy_kernel,
        out_shape=jax.ShapeDtypeStruct((B, width), x2.dtype),
        grid=grid,
        in_specs=[pl.BlockSpec((tm, width), lambda i: (i, 0))],
        out_specs=pl.BlockSpec((tm, width), lambda i: (i, 0)),
        compiler_params=pltpu.CompilerParams(
            dimension_semantics=dim_sem,
            vmem_limit_bytes=vmem_limit),
        cost_estimate=pl.CostEstimate(
            flops=0, transcendentals=0,
            bytes_accessed=2 * B * width * dtype_bytes),
    )(x2)


# ----------------------------------------------------------------------------
# Module wrapper
# ----------------------------------------------------------------------------
class Position:
    """JAX/Pallas port of the PyTorch `Position` module (no parameters)."""

    def __init__(self, dim_orig: int, dim_emb: int):
        self.dim_orig = dim_orig
        self.dim_emb = dim_emb

    def __call__(self, x: jnp.ndarray, *, mode: str = "auto",
                 tile_rows=None, core_parallel: bool = False) -> jnp.ndarray:
        # forward(): 1-D inputs get a trailing singleton dim (torch unsqueeze(1)).
        if x.ndim == 1:
            x = x[:, None]
        assert x.shape[-1] == self.dim_orig, (
            "Input tensor's dimension is {}, position is initialized with "
            "input dimension {}".format(x.shape[-1], self.dim_orig))

        # torch `[..., :dim_emb]` clamps to the available width.
        width = min(self.dim_emb, self.dim_orig)
        lead_shape = x.shape[:-1]

        # Identity short-circuit: the slice keeps every column and clone() is
        # free on immutable JAX arrays -> no kernel, no HBM traffic at all.
        if width == self.dim_orig:
            return x

        x2 = x.reshape(-1, self.dim_orig)
        B = x2.shape[0]
        lane_dense = (width % _LANE == 0) and (width >= _LANE)

        if mode == "auto":
            mode = "dma" if (lane_dense and B >= _MIN_PALLAS_ROWS) else "xla"
        if mode in ("dma", "vmem") and not lane_dense:
            raise ValueError(
                f"mode={mode!r} requires the effective output width to be a "
                f"multiple of 128 (got {width}); use mode='auto' or 'xla'.")

        if mode == "dma":
            out2 = _position_slice_dma(x2, width)
        elif mode == "vmem":
            out2 = _position_slice_vmem(x2, width, tile_rows=tile_rows,
                                        core_parallel=core_parallel)
        elif mode == "xla":
            # Narrow-lane / tiny-batch: a pallas_call would only add masked
            # vst.msk partial stores and an HBM round-trip XLA can fuse away.
            out2 = x2[:, :width]
        else:
            raise ValueError(f"unknown mode {mode!r}")

        return out2.reshape(*lead_shape, width)


if __name__ == "__main__":
    key = jax.random.PRNGKey(0)
    k0, k1, k2, k3, k4, k5 = jax.random.split(key, 6)

    dim_orig, dim_emb = 256, 128
    pos = Position(dim_orig=dim_orig, dim_emb=dim_emb)

    # --- Default path: chunked HBM->HBM DMA slice, f32, 3-D input -----------
    x = jax.random.normal(k0, (4, 64, dim_orig), dtype=jnp.float32)  # B = 256
    out = jax.block_until_ready(pos(x))
    assert out.shape == (4, 64, dim_emb)
    assert out.dtype == x.dtype
    assert bool(jnp.array_equal(out, x[..., :dim_emb]))

    # --- DMA path, bf16 (16-row sublane chunk alignment) --------------------
    xb = jax.random.normal(k1, (64, dim_orig), dtype=jnp.bfloat16)
    outb = jax.block_until_ready(pos(xb, mode="dma"))
    assert bool(jnp.array_equal(outb, xb[:, :dim_emb]))

    # --- VMEM pipeline path with an explicit multi-step grid ----------------
    xg = jax.random.normal(k2, (192, dim_orig), dtype=jnp.float32)
    outg = jax.block_until_ready(pos(xg, mode="vmem", tile_rows=64))  # grid=(3,)
    assert bool(jnp.array_equal(outg, xg[:, :dim_emb]))

    # --- VMEM pipeline path with auto-sized (full-extent) tile --------------
    outg2 = jax.block_until_ready(pos(xg, mode="vmem"))
    assert bool(jnp.array_equal(outg2, xg[:, :dim_emb]))

    # --- Identity short-circuit (dim_emb >= dim_orig): no kernel, no copy ---
    pos_id = Position(dim_orig=32, dim_emb=64)
    xi = jax.random.normal(k3, (8, 32), dtype=jnp.float32)
    outi = jax.block_until_ready(pos_id(xi))
    assert outi.shape == (8, 32)
    assert bool(jnp.array_equal(outi, xi))

    # --- Narrow-lane fallback (dim_emb < 128): plain XLA slice --------------
    pos_small = Position(dim_orig=16, dim_emb=8)
    xs = jax.random.normal(k4, (16, 16), dtype=jnp.float32)
    outs = jax.block_until_ready(pos_small(xs))
    assert outs.shape == (16, 8)
    assert bool(jnp.array_equal(outs, xs[:, :8]))

    # --- 1-D path (torch unsqueeze(1)) ---------------------------------------
    pos1 = Position(dim_orig=1, dim_emb=1)
    x1 = jax.random.normal(k5, (8,), dtype=jnp.float32)
    out1 = jax.block_until_ready(pos1(x1))
    assert out1.shape == (8, 1)
    assert bool(jnp.array_equal(out1, x1[:, None]))

    print("KERNEL_OK")
</pallas_src>

<mosaic_0001>
module attributes {stable_mosaic.version = 11 : i64} {
  func.func @kernel(%arg0: memref<256x256xf32, #tpu.memory_space<any>>, %arg1: memref<256x128xf32, #tpu.memory_space<any>>, %arg2: memref<4x!tpu.dma_semaphore, #tpu.memory_space<semaphore_mem>>) attributes {dimension_semantics = [], scalar_prefetch = 0 : i64, scratch_operands = 1 : i64, tpu.core_type = #tpu.core_type<tc>} {
    %c0_i32 = arith.constant 0 : i32
    %c0_i32_0 = arith.constant 0 : i32
    %c0_i32_1 = arith.constant 0 : i32
    %0 = tpu.memref_slice %arg0[%c0_i32_0, %c0_i32_1] : memref<256x256xf32, #tpu.memory_space<any>> -> memref<64x128xf32, #tpu.memory_space<any>>
    %c0_i32_2 = arith.constant 0 : i32
    %c0_i32_3 = arith.constant 0 : i32
    %1 = tpu.memref_slice %arg1[%c0_i32_2, %c0_i32_3] : memref<256x128xf32, #tpu.memory_space<any>> -> memref<64x128xf32, #tpu.memory_space<any>>
    %2 = tpu.memref_slice %arg2[%c0_i32] : memref<4x!tpu.dma_semaphore, #tpu.memory_space<semaphore_mem>> -> memref<1x!tpu.dma_semaphore, #tpu.memory_space<semaphore_mem>>
    %3 = tpu.memref_squeeze %2 : memref<1x!tpu.dma_semaphore, #tpu.memory_space<semaphore_mem>> -> memref<!tpu.dma_semaphore, #tpu.memory_space<semaphore_mem>>
    tpu.enqueue_dma source(%0 : memref<64x128xf32, #tpu.memory_space<any>>) target(%1 : memref<64x128xf32, #tpu.memory_space<any>>) target_semaphore(%3 : memref<!tpu.dma_semaphore, #tpu.memory_space<semaphore_mem>>)
    %c1_i32 = arith.constant 1 : i32
    %c64_i32 = arith.constant 64 : i32
    %c0_i32_4 = arith.constant 0 : i32
    %4 = tpu.memref_slice %arg0[%c64_i32, %c0_i32_4] : memref<256x256xf32, #tpu.memory_space<any>> -> memref<64x128xf32, #tpu.memory_space<any>>
    %c64_i32_5 = arith.constant 64 : i32
    %c0_i32_6 = arith.constant 0 : i32
    %5 = tpu.memref_slice %arg1[%c64_i32_5, %c0_i32_6] : memref<256x128xf32, #tpu.memory_space<any>> -> memref<64x128xf32, #tpu.memory_space<any>>
    %6 = tpu.memref_slice %arg2[%c1_i32] : memref<4x!tpu.dma_semaphore, #tpu.memory_space<semaphore_mem>> -> memref<1x!tpu.dma_semaphore, #tpu.memory_space<semaphore_mem>>
    %7 = tpu.memref_squeeze %6 : memref<1x!tpu.dma_semaphore, #tpu.memory_space<semaphore_mem>> -> memref<!tpu.dma_semaphore, #tpu.memory_space<semaphore_mem>>
    tpu.enqueue_dma source(%4 : memref<64x128xf32, #tpu.memory_space<any>>) target(%5 : memref<64x128xf32, #tpu.memory_space<any>>) target_semaphore(%7 : memref<!tpu.dma_semaphore, #tpu.memory_space<semaphore_mem>>)
    %c2_i32 = arith.constant 2 : i32
    %c128_i32 = arith.constant 128 : i32
    %c0_i32_7 = arith.constant 0 : i32
    %8 = tpu.memref_slice %arg0[%c128_i32, %c0_i32_7] : memref<256x256xf32, #tpu.memory_space<any>> -> memref<64x128xf32, #tpu.memory_space<any>>
    %c128_i32_8 = arith.constant 128 : i32
    %c0_i32_9 = arith.constant 0 : i32
    %9 = tpu.memref_slice %arg1[%c128_i32_8, %c0_i32_9] : memref<256x128xf32, #tpu.memory_space<any>> -> memref<64x128xf32, #tpu.memory_space<any>>
    %10 = tpu.memref_slice %arg2[%c2_i32] : memref<4x!tpu.dma_semaphore, #tpu.memory_space<semaphore_mem>> -> memref<1x!tpu.dma_semaphore, #tpu.memory_space<semaphore_mem>>
    %11 = tpu.memref_squeeze %10 : memref<1x!tpu.dma_semaphore, #tpu.memory_space<semaphore_mem>> -> memref<!tpu.dma_semaphore, #tpu.memory_space<semaphore_mem>>
    tpu.enqueue_dma source(%8 : memref<64x128xf32, #tpu.memory_space<any>>) target(%9 : memref<64x128xf32, #tpu.memory_space<any>>) target_semaphore(%11 : memref<!tpu.dma_semaphore, #tpu.memory_space<semaphore_mem>>)
    %c3_i32 = arith.constant 3 : i32
    %c192_i32 = arith.constant 192 : i32
    %c0_i32_10 = arith.constant 0 : i32
    %12 = tpu.memref_slice %arg0[%c192_i32, %c0_i32_10] : memref<256x256xf32, #tpu.memory_space<any>> -> memref<64x128xf32, #tpu.memory_space<any>>
    %c192_i32_11 = arith.constant 192 : i32
    %c0_i32_12 = arith.constant 0 : i32
    %13 = tpu.memref_slice %arg1[%c192_i32_11, %c0_i32_12] : memref<256x128xf32, #tpu.memory_space<any>> -> memref<64x128xf32, #tpu.memory_space<any>>
    %14 = tpu.memref_slice %arg2[%c3_i32] : memref<4x!tpu.dma_semaphore, #tpu.memory_space<semaphore_mem>> -> memref<1x!tpu.dma_semaphore, #tpu.memory_space<semaphore_mem>>
    %15 = tpu.memref_squeeze %14 : memref<1x!tpu.dma_semaphore, #tpu.memory_space<semaphore_mem>> -> memref<!tpu.dma_semaphore, #tpu.memory_space<semaphore_mem>>
    tpu.enqueue_dma source(%12 : memref<64x128xf32, #tpu.memory_space<any>>) target(%13 : memref<64x128xf32, #tpu.memory_space<any>>) target_semaphore(%15 : memref<!tpu.dma_semaphore, #tpu.memory_space<semaphore_mem>>)
    %c0_i32_13 = arith.constant 0 : i32
    %c0_i32_14 = arith.constant 0 : i32
    %c0_i32_15 = arith.constant 0 : i32
    %16 = tpu.memref_slice %arg0[%c0_i32_14, %c0_i32_15] : memref<256x256xf32, #tpu.memory_space<any>> -> memref<64x128xf32, #tpu.memory_space<any>>
    %c0_i32_16 = arith.constant 0 : i32
    %c0_i32_17 = arith.constant 0 : i32
    %17 = tpu.memref_slice %arg1[%c0_i32_16, %c0_i32_17] : memref<256x128xf32, #tpu.memory_space<any>> -> memref<64x128xf32, #tpu.memory_space<any>>
    %18 = tpu.memref_slice %arg2[%c0_i32_13] : memref<4x!tpu.dma_semaphore, #tpu.memory_space<semaphore_mem>> -> memref<1x!tpu.dma_semaphore, #tpu.memory_space<semaphore_mem>>
    %19 = tpu.memref_squeeze %18 : memref<1x!tpu.dma_semaphore, #tpu.memory_space<semaphore_mem>> -> memref<!tpu.dma_semaphore, #tpu.memory_space<semaphore_mem>>
    tpu.wait_dma2 semaphore(%19 : memref<!tpu.dma_semaphore, #tpu.memory_space<semaphore_mem>>) src(%16 : memref<64x128xf32, #tpu.memory_space<any>>) dst(%17 : memref<64x128xf32, #tpu.memory_space<any>>)
    %c1_i32_18 = arith.constant 1 : i32
    %c64_i32_19 = arith.constant 64 : i32
    %c0_i32_20 = arith.constant 0 : i32
    %20 = tpu.memref_slice %arg0[%c64_i32_19, %c0_i32_20] : memref<256x256xf32, #tpu.memory_space<any>> -> memref<64x128xf32, #tpu.memory_space<any>>
    %c64_i32_21 = arith.constant 64 : i32
    %c0_i32_22 = arith.constant 0 : i32
    %21 = tpu.memref_slice %arg1[%c64_i32_21, %c0_i32_22] : memref<256x128xf32, #tpu.memory_space<any>> -> memref<64x128xf32, #tpu.memory_space<any>>
    %22 = tpu.memref_slice %arg2[%c1_i32_18] : memref<4x!tpu.dma_semaphore, #tpu.memory_space<semaphore_mem>> -> memref<1x!tpu.dma_semaphore, #tpu.memory_space<semaphore_mem>>
    %23 = tpu.memref_squeeze %22 : memref<1x!tpu.dma_semaphore, #tpu.memory_space<semaphore_mem>> -> memref<!tpu.dma_semaphore, #tpu.memory_space<semaphore_mem>>
    tpu.wait_dma2 semaphore(%23 : memref<!tpu.dma_semaphore, #tpu.memory_space<semaphore_mem>>) src(%20 : memref<64x128xf32, #tpu.memory_space<any>>) dst(%21 : memref<64x128xf32, #tpu.memory_space<any>>)
    %c2_i32_23 = arith.constant 2 : i32
    %c128_i32_24 = arith.constant 128 : i32
    %c0_i32_25 = arith.constant 0 : i32
    %24 = tpu.memref_slice %arg0[%c128_i32_24, %c0_i32_25] : memref<256x256xf32, #tpu.memory_space<any>> -> memref<64x128xf32, #tpu.memory_space<any>>
    %c128_i32_26 = arith.constant 128 : i32
    %c0_i32_27 = arith.constant 0 : i32
    %25 = tpu.memref_slice %arg1[%c128_i32_26, %c0_i32_27] : memref<256x128xf32, #tpu.memory_space<any>> -> memref<64x128xf32, #tpu.memory_space<any>>
    %26 = tpu.memref_slice %arg2[%c2_i32_23] : memref<4x!tpu.dma_semaphore, #tpu.memory_space<semaphore_mem>> -> memref<1x!tpu.dma_semaphore, #tpu.memory_space<semaphore_mem>>
    %27 = tpu.memref_squeeze %26 : memref<1x!tpu.dma_semaphore, #tpu.memory_space<semaphore_mem>> -> memref<!tpu.dma_semaphore, #tpu.memory_space<semaphore_mem>>
    tpu.wait_dma2 semaphore(%27 : memref<!tpu.dma_semaphore, #tpu.memory_space<semaphore_mem>>) src(%24 : memref<64x128xf32, #tpu.memory_space<any>>) dst(%25 : memref<64x128xf32, #tpu.memory_space<any>>)
    %c3_i32_28 = arith.constant 3 : i32
    %c192_i32_29 = arith.constant 192 : i32
    %c0_i32_30 = arith.constant 0 : i32
    %28 = tpu.memref_slice %arg0[%c192_i32_29, %c0_i32_30] : memref<256x256xf32, #tpu.memory_space<any>> -> memref<64x128xf32, #tpu.memory_space<any>>
    %c192_i32_31 = arith.constant 192 : i32
    %c0_i32_32 = arith.constant 0 : i32
    %29 = tpu.memref_slice %arg1[%c192_i32_31, %c0_i32_32] : memref<256x128xf32, #tpu.memory_space<any>> -> memref<64x128xf32, #tpu.memory_space<any>>
    %30 = tpu.memref_slice %arg2[%c3_i32_28] : memref<4x!tpu.dma_semaphore, #tpu.memory_space<semaphore_mem>> -> memref<1x!tpu.dma_semaphore, #tpu.memory_space<semaphore_mem>>
    %31 = tpu.memref_squeeze %30 : memref<1x!tpu.dma_semaphore, #tpu.memory_space<semaphore_mem>> -> memref<!tpu.dma_semaphore, #tpu.memory_space<semaphore_mem>>
    tpu.wait_dma2 semaphore(%31 : memref<!tpu.dma_semaphore, #tpu.memory_space<semaphore_mem>>) src(%28 : memref<64x128xf32, #tpu.memory_space<any>>) dst(%29 : memref<64x128xf32, #tpu.memory_space<any>>)
    return
  }
}

</mosaic_0001>

<llo_original>
// kernel: tpu_custom_call.1
$region0: #{tpu_custom_call.1}
  #allocation0 [shape = 'u32[]', space=smem, size = 0x4, offset = 0x4, fixed_abs, tag = 'smem constant byte address 0x4 - core index']
  #allocation1 [shape = 'u32[144,128]{1,0:T(1,128)}', space=vmem, size = 0x12000, scoped, tag = 'internal scratch']
  #allocation2 [shape = 's32[4]{0}', space=sflag, size = 0x10, scoped, tag = 'scratch operand']
  #allocation3 [shape = 's32[]', space=sflag, size = 0x4, offset = 0, fixed_abs, tag = 'sflag constant byte address 0x0 - dummy sync flag']
  #allocation5 [shape = 's32[]', space=sflag, size = 0x4, offset = 0, fixed_abs, tag = 'sflag constant byte address 0x0 - dummy sync flag']
  #allocation7 [shape = 's32[]', space=sflag, size = 0x4, offset = 0, fixed_abs, tag = 'sflag constant byte address 0x0 - dummy sync flag']
  #allocation9 [shape = 's32[]', space=sflag, size = 0x4, offset = 0, fixed_abs, tag = 'sflag constant byte address 0x0 - dummy sync flag']
  %s0 = inlined_call_operand.hbm [shape: f32[256,256], index: 0, kind: input, shape index: {}]
  %s1 = inlined_call_operand.hbm [shape: f32[256,128], index: 1, kind: output, shape index: {}]
  %s2 = sld [smem:[#allocation0]]
  $region2: #{tpu_custom_call.1} parent=0
    _
  %s4 = ssub.s32 1, %s2
  %s5 = scalar_select 0, %s4, %s2
  $region1: #{tpu_custom_call.1} parent=0
    #allocation4 [shape = 'u32[3]{0}', space=smem, size = 0xc, scoped, tag = 'DMA stride descriptor']
    #allocation6 [shape = 'u32[3]{0}', space=smem, size = 0xc, scoped, tag = 'DMA stride descriptor']
    #allocation8 [shape = 'u32[3]{0}', space=smem, size = 0xc, scoped, tag = 'DMA stride descriptor']
    #allocation10 [shape = 'u32[3]{0}', space=smem, size = 0xc, scoped, tag = 'DMA stride descriptor']
    %s7 = sshll.u32 1, 14
    %s8 = sxor.u32 4294967295, %s7
    %s11 = sshll.u32 3, 24
    %s12 = sxor.u32 4294967295, %s11
    %s13 = sand.u32 0, %s12
    %s15 = sor.u32 %s13, 0
    %18 = sst [smem:[#allocation4]] 256
    %s19 = scalar_lea.smem [#allocation4], 1
    %20 = sst [smem:[%s19]] 128
    %s21 = scalar_lea.smem [#allocation4], 2
    %22 = sst [smem:[%s21]] 8
    %24 = dma.general %s0, 1024, %s1, [#allocation2], [#allocation3], [#allocation4], %s15, 0
    %s25 = scalar_lea.hbm %s0, 2048
    %s26 = scalar_lea.hbm %s1, 1024
    %s27 = scalar_lea.sflag [#allocation2], 1
    %s29 = sshll.u32 1, 14
    %s30 = sxor.u32 4294967295, %s29
    %s33 = sshll.u32 3, 24
    %s34 = sxor.u32 4294967295, %s33
    %s35 = sand.u32 0, %s34
    %s37 = sor.u32 %s35, 0
    %40 = sst [smem:[#allocation6]] 256
    %s41 = scalar_lea.smem [#allocation6], 1
    %42 = sst [smem:[%s41]] 128
    %s43 = scalar_lea.smem [#allocation6], 2
    %44 = sst [smem:[%s43]] 8
    %46 = dma.general %s25, 1024, %s26, %s27, [#allocation5], [#allocation6], %s37, 0
    %s47 = scalar_lea.hbm %s0, 4096
    %s48 = scalar_lea.hbm %s1, 2048
    %s49 = scalar_lea.sflag [#allocation2], 2
    %s51 = sshll.u32 1, 14
    %s52 = sxor.u32 4294967295, %s51
    %s55 = sshll.u32 3, 24
    %s56 = sxor.u32 4294967295, %s55
    %s57 = sand.u32 0, %s56
    %s59 = sor.u32 %s57, 0
    %62 = sst [smem:[#allocation8]] 256
    %s63 = scalar_lea.smem [#allocation8], 1
    %64 = sst [smem:[%s63]] 128
    %s65 = scalar_lea.smem [#allocation8], 2
    %66 = sst [smem:[%s65]] 8
    %68 = dma.general %s47, 1024, %s48, %s49, [#allocation7], [#allocation8], %s59, 0
    %s69 = scalar_lea.hbm %s0, 6144
    %s70 = scalar_lea.hbm %s1, 3072
    %s71 = scalar_lea.sflag [#allocation2], 3
    %s73 = sshll.u32 1, 14
    %s74 = sxor.u32 4294967295, %s73
    %s77 = sshll.u32 3, 24
    %s78 = sxor.u32 4294967295, %s77
    %s79 = sand.u32 0, %s78
    %s81 = sor.u32 %s79, 0
    %84 = sst [smem:[#allocation10]] 256
    %s85 = scalar_lea.smem [#allocation10], 1
    %86 = sst [smem:[%s85]] 128
    %s87 = scalar_lea.smem [#allocation10], 2
    %88 = sst [smem:[%s87]] 8
    %90 = dma.general %s69, 1024, %s70, %s71, [#allocation9], [#allocation10], %s81, 0
    %s91 = smul.u32 8, 8
    %s92 = smul.u32 %s91, 1
    %s93 = sshll.u32 %s92, 4
    %94 = dma.done [#allocation2], %s93
    %s95 = sshll.u32 %s92, 4
    %96 = dma.done %s27, %s95
    %s97 = sshll.u32 %s92, 4
    %98 = dma.done %s49, %s97
    %s99 = sshll.u32 %s92, 4
    %100 = dma.done %s71, %s99
  %101 = vsyncmov [#allocation2]
  %s102 = vpop.sfrf %101
  %p103 = scmp.eq.s32.totalorder %s102, 0
  %p104 = pneg %p103
  %106 = shalt.err (%p104)
  %s107 = scalar_lea.sflag [#allocation2], 1
  %108 = vsyncmov %s107
  %s109 = vpop.sfrf %108
  %p110 = scmp.eq.s32.totalorder %s109, 0
  %p111 = pneg %p110
  %113 = shalt.err (%p111)
  %s114 = scalar_lea.sflag [#allocation2], 2
  %115 = vsyncmov %s114
  %s116 = vpop.sfrf %115
  %p117 = scmp.eq.s32.totalorder %s116, 0
  %p118 = pneg %p117
  %120 = shalt.err (%p118)
  %s121 = scalar_lea.sflag [#allocation2], 3
  %122 = vsyncmov %s121
  %s123 = vpop.sfrf %122
  %p124 = scmp.eq.s32.totalorder %s123, 0
  %p125 = pneg %p124
  %127 = shalt.err (%p125)

</llo_original>
